<compile_context>
chip_gen: v7x
topology: tpu7x:2x2x1
jax: 0.10.0
libtpu: 0.0.40
codegen_flags: <defaults>
</compile_context>

<pallas_src>
import functools

import jax
import jax.numpy as jnp
from jax import lax
from jax.experimental import pallas as pl

_BN_EPS = 1e-5
_LANE = 128


def _bn_affine(h, gamma, beta, relu):
    """Train-mode BatchNorm1d folded to a single scale/shift, one-pass statistics."""
    inv_b = 1.0 / h.shape[0]
    s1 = jnp.sum(h, axis=0, keepdims=True)            # one sweep over (B, n)
    s2 = jnp.sum(h * h, axis=0, keepdims=True)
    mean = s1 * inv_b
    var = jnp.maximum(s2 * inv_b - mean * mean, 0.0)   # clamp vs. cancellation
    scale = gamma * lax.rsqrt(var + _BN_EPS)           # (1, n) vreg math, EUP rsqrt
    shift = beta - mean * scale                        # (1, n)
    out = h * scale + shift                            # single mul+add on (B, n)
    if relu:
        out = jnp.maximum(out, 0.0)
    return out


def sw_nn_kernel(
    x_ref,
    w1_ref, g1_ref, be1_ref,        # block1: Linear (bias dropped) + BN
    wt_ref, gt_ref, bet_ref,        # block_temp (shared, applied n_layer times)
    wsc_ref, gsc_ref, besc_ref,     # shortcut Linear (bias dropped) + BN
    w3_ref, b3_ref,                 # final Linear (bias kept — no BN after it)
    out_ref,
    *, n_layer,
):
    x = x_ref[...].astype(jnp.float32)

    # block1 = Linear -> BN -> ReLU  (Linear bias cancelled by train-mode BN)
    h = jnp.dot(x, w1_ref[...], preferred_element_type=jnp.float32)
    h = _bn_affine(h, g1_ref[...], be1_ref[...], relu=True)

    # block2 = the SAME block_temp module applied n_layer times (shared weights)
    def body(_, h):
        hh = jnp.dot(h, wt_ref[...], preferred_element_type=jnp.float32)
        return _bn_affine(hh, gt_ref[...], bet_ref[...], relu=True)

    h = lax.fori_loop(0, n_layer, body, h, unroll=True)

    # shortcut path: Linear -> BN (no ReLU; bias cancelled by BN)
    sc = jnp.dot(x, wsc_ref[...], preferred_element_type=jnp.float32)
    sc = _bn_affine(sc, gsc_ref[...], besc_ref[...], relu=False)

    # residual add + ReLU
    h = jnp.maximum(h + sc, 0.0)

    # layer_3 — output is lane-dense (padded to a multiple of 128), unmasked store
    out = jnp.dot(h, w3_ref[...], preferred_element_type=jnp.float32) + b3_ref[...]
    out_ref[...] = out.astype(out_ref.dtype)


def sw_nn_forward(x, params, n_layer):
    """x: (B, n_feature) float32. params: dict of arrays (see init_params)."""
    B, _ = x.shape
    n_coe = params["w3"].shape[1]
    n_out_pad = pl.cdiv(n_coe, _LANE) * _LANE

    # Pad the final Linear so the kernel's output last dim is lane-dense (128-multiple).
    # Padded columns are exactly zero and are sliced off below — pure layout plumbing.
    w3 = jnp.pad(params["w3"], ((0, 0), (0, n_out_pad - n_coe)))
    b3 = jnp.pad(params["b3"], ((0, 0), (0, n_out_pad - n_coe)))

    operands = (
        x,
        params["w1"], params["g1"], params["be1"],
        params["wt"], params["gt"], params["bet"],
        params["wsc"], params["gsc"], params["besc"],
        w3, b3,
    )

    def full_spec(shape):
        # whole array as a single block (everything here fits VMEM comfortably)
        return pl.BlockSpec(shape, lambda: tuple(0 for _ in shape))

    kernel = functools.partial(sw_nn_kernel, n_layer=n_layer)

    out = pl.pallas_call(
        kernel,
        out_shape=jax.ShapeDtypeStruct((B, n_out_pad), jnp.float32),
        grid=(),
        in_specs=[full_spec(op.shape) for op in operands],
        out_specs=full_spec((B, n_out_pad)),
    )(*operands)
    return out[:, :n_coe]


def init_params(key, n_feature, n_coe, n_neuron):
    """Deterministic synthetic parameters. Linear weights generated in PyTorch
    (out, in) convention then transposed to (in, out) for the kernel. Pre-BN biases
    are kept here only so the reference can prove they are algebraic no-ops."""
    ks = jax.random.split(key, 10)

    def lin(k, n_in, n_out):
        kw, kb = jax.random.split(k)
        bound = 1.0 / jnp.sqrt(n_in)
        w_pt = jax.random.uniform(kw, (n_out, n_in), jnp.float32, -bound, bound)
        b = jax.random.uniform(kb, (1, n_out), jnp.float32, -bound, bound)
        return w_pt.T, b  # (in, out), (1, out)

    w1, b1 = lin(ks[0], n_feature, n_neuron)
    wt, bt = lin(ks[1], n_neuron, n_neuron)
    wsc, bsc = lin(ks[2], n_feature, n_neuron)
    w3, b3 = lin(ks[3], n_neuron, n_coe)

    def bn(k, n):
        kg, kb = jax.random.split(k)
        g = 1.0 + 0.1 * jax.random.normal(kg, (1, n), jnp.float32)
        b = 0.1 * jax.random.normal(kb, (1, n), jnp.float32)
        return g, b

    g1, be1 = bn(ks[4], n_neuron)
    gt, bet = bn(ks[5], n_neuron)
    gsc, besc = bn(ks[6], n_neuron)

    return dict(
        w1=w1, b1=b1, g1=g1, be1=be1,
        wt=wt, bt=bt, gt=gt, bet=bet,
        wsc=wsc, bsc=bsc, gsc=gsc, besc=besc,
        w3=w3, b3=b3,
    )


def _bn_ref(h, gamma, beta, eps=_BN_EPS):
    # Two-pass, bias-including reference (mirrors PyTorch train-mode BatchNorm1d).
    mean = jnp.mean(h, axis=0, keepdims=True)
    var = jnp.mean((h - mean) ** 2, axis=0, keepdims=True)
    return gamma * (h - mean) * lax.rsqrt(var + eps) + beta


def reference_forward(x, p, n_layer):
    """Pure-JAX reference mirroring the PyTorch forward exactly (with pre-BN biases)."""
    h = jnp.maximum(_bn_ref(x @ p["w1"] + p["b1"], p["g1"], p["be1"]), 0.0)
    for _ in range(n_layer):
        h = jnp.maximum(_bn_ref(h @ p["wt"] + p["bt"], p["gt"], p["bet"]), 0.0)
    sc = _bn_ref(x @ p["wsc"] + p["bsc"], p["gsc"], p["besc"])
    h = jnp.maximum(h + sc, 0.0)
    return h @ p["w3"] + p["b3"]


if __name__ == "__main__":
    n_feature, n_coe, n_neuron, n_layer = 16, 4, 32, 2
    batch = 8

    key = jax.random.PRNGKey(0)
    kx, kp = jax.random.split(key)
    x = jax.random.normal(kx, (batch, n_feature), jnp.float32)
    params = init_params(kp, n_feature, n_coe, n_neuron)

    out = sw_nn_forward(x, params, n_layer)
    out = jax.block_until_ready(out)

    ref = reference_forward(x, params, n_layer)
    assert out.shape == (batch, n_coe), out.shape
    assert jnp.allclose(out, ref, atol=1e-4, rtol=1e-4), jnp.max(jnp.abs(out - ref))

    print("KERNEL_OK")
</pallas_src>

<mosaic_0001>
module attributes {stable_mosaic.version = 11 : i64} {
  func.func @sw_nn_kernel(%arg0: memref<8x16xf32, #tpu.memory_space<vmem>>, %arg1: memref<16x32xf32, #tpu.memory_space<vmem>>, %arg2: memref<1x32xf32, #tpu.memory_space<vmem>>, %arg3: memref<1x32xf32, #tpu.memory_space<vmem>>, %arg4: memref<32x32xf32, #tpu.memory_space<vmem>>, %arg5: memref<1x32xf32, #tpu.memory_space<vmem>>, %arg6: memref<1x32xf32, #tpu.memory_space<vmem>>, %arg7: memref<16x32xf32, #tpu.memory_space<vmem>>, %arg8: memref<1x32xf32, #tpu.memory_space<vmem>>, %arg9: memref<1x32xf32, #tpu.memory_space<vmem>>, %arg10: memref<32x128xf32, #tpu.memory_space<vmem>>, %arg11: memref<1x128xf32, #tpu.memory_space<vmem>>, %arg12: memref<8x128xf32, #tpu.memory_space<vmem>>) attributes {dimension_semantics = [], scalar_prefetch = 0 : i64, scratch_operands = 0 : i64, tpu.core_type = #tpu.core_type<tc>} {
    %c0 = arith.constant 0 : index
    %c0_0 = arith.constant 0 : index
    %0 = vector.load %arg0[%c0, %c0_0] : memref<8x16xf32, #tpu.memory_space<vmem>>, vector<8x16xf32>
    %c0_1 = arith.constant 0 : index
    %c0_2 = arith.constant 0 : index
    %1 = vector.load %arg1[%c0_1, %c0_2] : memref<16x32xf32, #tpu.memory_space<vmem>>, vector<16x32xf32>
    %cst = arith.constant dense<0.000000e+00> : vector<8x32xf32>
    %2 = tpu.matmul %0, %1, %cst {dimension_numbers = #tpu.dot_dimension_numbers<[1], [0], [0], [1], [0, 0, 1, 1], [], []>} : vector<8x16xf32>, vector<16x32xf32>, vector<8x32xf32> -> vector<8x32xf32>
    %c0_3 = arith.constant 0 : index
    %c0_4 = arith.constant 0 : index
    %3 = vector.load %arg2[%c0_3, %c0_4] : memref<1x32xf32, #tpu.memory_space<vmem>>, vector<1x32xf32>
    %c0_5 = arith.constant 0 : index
    %c0_6 = arith.constant 0 : index
    %4 = vector.load %arg3[%c0_5, %c0_6] : memref<1x32xf32, #tpu.memory_space<vmem>>, vector<1x32xf32>
    %cst_7 = arith.constant dense<0.000000e+00> : vector<32xf32>
    %5 = vector.multi_reduction <add>, %2, %cst_7 [0] : vector<8x32xf32> to vector<32xf32>
    %6 = vector.shape_cast %5 : vector<32xf32> to vector<1x32xf32>
    %7 = arith.mulf %2, %2 : vector<8x32xf32>
    %cst_8 = arith.constant dense<0.000000e+00> : vector<32xf32>
    %8 = vector.multi_reduction <add>, %7, %cst_8 [0] : vector<8x32xf32> to vector<32xf32>
    %9 = vector.shape_cast %8 : vector<32xf32> to vector<1x32xf32>
    %cst_9 = arith.constant 1.250000e-01 : f32
    %10 = vector.broadcast %cst_9 : f32 to vector<1x32xf32>
    %11 = arith.mulf %6, %10 : vector<1x32xf32>
    %cst_10 = arith.constant 1.250000e-01 : f32
    %12 = vector.broadcast %cst_10 : f32 to vector<1x32xf32>
    %13 = arith.mulf %9, %12 : vector<1x32xf32>
    %14 = arith.mulf %11, %11 : vector<1x32xf32>
    %15 = arith.subf %13, %14 : vector<1x32xf32>
    %cst_11 = arith.constant 0.000000e+00 : f32
    %16 = vector.broadcast %cst_11 : f32 to vector<1x32xf32>
    %17 = arith.maximumf %15, %16 : vector<1x32xf32>
    %cst_12 = arith.constant 9.99999974E-6 : f32
    %18 = vector.broadcast %cst_12 : f32 to vector<1x32xf32>
    %19 = arith.addf %17, %18 : vector<1x32xf32>
    %20 = math.rsqrt %19 : vector<1x32xf32>
    %21 = arith.mulf %3, %20 : vector<1x32xf32>
    %22 = arith.mulf %11, %21 : vector<1x32xf32>
    %23 = arith.subf %4, %22 : vector<1x32xf32>
    %24 = vector.broadcast %21 : vector<1x32xf32> to vector<8x32xf32>
    %25 = arith.mulf %2, %24 : vector<8x32xf32>
    %26 = vector.broadcast %23 : vector<1x32xf32> to vector<8x32xf32>
    %27 = arith.addf %25, %26 : vector<8x32xf32>
    %cst_13 = arith.constant 0.000000e+00 : f32
    %28 = vector.broadcast %cst_13 : f32 to vector<8x32xf32>
    %29 = arith.maximumf %27, %28 : vector<8x32xf32>
    %c0_i32 = arith.constant 0 : i32
    %c0_14 = arith.constant 0 : index
    %c0_15 = arith.constant 0 : index
    %30 = vector.load %arg4[%c0_14, %c0_15] : memref<32x32xf32, #tpu.memory_space<vmem>>, vector<32x32xf32>
    %cst_16 = arith.constant dense<0.000000e+00> : vector<8x32xf32>
    %31 = tpu.matmul %29, %30, %cst_16 {dimension_numbers = #tpu.dot_dimension_numbers<[1], [0], [0], [1], [0, 0, 1, 1], [], []>} : vector<8x32xf32>, vector<32x32xf32>, vector<8x32xf32> -> vector<8x32xf32>
    %c0_17 = arith.constant 0 : index
    %c0_18 = arith.constant 0 : index
    %32 = vector.load %arg5[%c0_17, %c0_18] : memref<1x32xf32, #tpu.memory_space<vmem>>, vector<1x32xf32>
    %c0_19 = arith.constant 0 : index
    %c0_20 = arith.constant 0 : index
    %33 = vector.load %arg6[%c0_19, %c0_20] : memref<1x32xf32, #tpu.memory_space<vmem>>, vector<1x32xf32>
    %cst_21 = arith.constant dense<0.000000e+00> : vector<32xf32>
    %34 = vector.multi_reduction <add>, %31, %cst_21 [0] : vector<8x32xf32> to vector<32xf32>
    %35 = vector.shape_cast %34 : vector<32xf32> to vector<1x32xf32>
    %36 = arith.mulf %31, %31 : vector<8x32xf32>
    %cst_22 = arith.constant dense<0.000000e+00> : vector<32xf32>
    %37 = vector.multi_reduction <add>, %36, %cst_22 [0] : vector<8x32xf32> to vector<32xf32>
    %38 = vector.shape_cast %37 : vector<32xf32> to vector<1x32xf32>
    %cst_23 = arith.constant 1.250000e-01 : f32
    %39 = vector.broadcast %cst_23 : f32 to vector<1x32xf32>
    %40 = arith.mulf %35, %39 : vector<1x32xf32>
    %cst_24 = arith.constant 1.250000e-01 : f32
    %41 = vector.broadcast %cst_24 : f32 to vector<1x32xf32>
    %42 = arith.mulf %38, %41 : vector<1x32xf32>
    %43 = arith.mulf %40, %40 : vector<1x32xf32>
    %44 = arith.subf %42, %43 : vector<1x32xf32>
    %cst_25 = arith.constant 0.000000e+00 : f32
    %45 = vector.broadcast %cst_25 : f32 to vector<1x32xf32>
    %46 = arith.maximumf %44, %45 : vector<1x32xf32>
    %cst_26 = arith.constant 9.99999974E-6 : f32
    %47 = vector.broadcast %cst_26 : f32 to vector<1x32xf32>
    %48 = arith.addf %46, %47 : vector<1x32xf32>
    %49 = math.rsqrt %48 : vector<1x32xf32>
    %50 = arith.mulf %32, %49 : vector<1x32xf32>
    %51 = arith.mulf %40, %50 : vector<1x32xf32>
    %52 = arith.subf %33, %51 : vector<1x32xf32>
    %53 = vector.broadcast %50 : vector<1x32xf32> to vector<8x32xf32>
    %54 = arith.mulf %31, %53 : vector<8x32xf32>
    %55 = vector.broadcast %52 : vector<1x32xf32> to vector<8x32xf32>
    %56 = arith.addf %54, %55 : vector<8x32xf32>
    %cst_27 = arith.constant 0.000000e+00 : f32
    %57 = vector.broadcast %cst_27 : f32 to vector<8x32xf32>
    %58 = arith.maximumf %56, %57 : vector<8x32xf32>
    %c1_i32 = arith.constant 1 : i32
    %c0_28 = arith.constant 0 : index
    %c0_29 = arith.constant 0 : index
    %59 = vector.load %arg4[%c0_28, %c0_29] : memref<32x32xf32, #tpu.memory_space<vmem>>, vector<32x32xf32>
    %cst_30 = arith.constant dense<0.000000e+00> : vector<8x32xf32>
    %60 = tpu.matmul %58, %59, %cst_30 {dimension_numbers = #tpu.dot_dimension_numbers<[1], [0], [0], [1], [0, 0, 1, 1], [], []>} : vector<8x32xf32>, vector<32x32xf32>, vector<8x32xf32> -> vector<8x32xf32>
    %c0_31 = arith.constant 0 : index
    %c0_32 = arith.constant 0 : index
    %61 = vector.load %arg5[%c0_31, %c0_32] : memref<1x32xf32, #tpu.memory_space<vmem>>, vector<1x32xf32>
    %c0_33 = arith.constant 0 : index
    %c0_34 = arith.constant 0 : index
    %62 = vector.load %arg6[%c0_33, %c0_34] : memref<1x32xf32, #tpu.memory_space<vmem>>, vector<1x32xf32>
    %cst_35 = arith.constant dense<0.000000e+00> : vector<32xf32>
    %63 = vector.multi_reduction <add>, %60, %cst_35 [0] : vector<8x32xf32> to vector<32xf32>
    %64 = vector.shape_cast %63 : vector<32xf32> to vector<1x32xf32>
    %65 = arith.mulf %60, %60 : vector<8x32xf32>
    %cst_36 = arith.constant dense<0.000000e+00> : vector<32xf32>
    %66 = vector.multi_reduction <add>, %65, %cst_36 [0] : vector<8x32xf32> to vector<32xf32>
    %67 = vector.shape_cast %66 : vector<32xf32> to vector<1x32xf32>
    %cst_37 = arith.constant 1.250000e-01 : f32
    %68 = vector.broadcast %cst_37 : f32 to vector<1x32xf32>
    %69 = arith.mulf %64, %68 : vector<1x32xf32>
    %cst_38 = arith.constant 1.250000e-01 : f32
    %70 = vector.broadcast %cst_38 : f32 to vector<1x32xf32>
    %71 = arith.mulf %67, %70 : vector<1x32xf32>
    %72 = arith.mulf %69, %69 : vector<1x32xf32>
    %73 = arith.subf %71, %72 : vector<1x32xf32>
    %cst_39 = arith.constant 0.000000e+00 : f32
    %74 = vector.broadcast %cst_39 : f32 to vector<1x32xf32>
    %75 = arith.maximumf %73, %74 : vector<1x32xf32>
    %cst_40 = arith.constant 9.99999974E-6 : f32
    %76 = vector.broadcast %cst_40 : f32 to vector<1x32xf32>
    %77 = arith.addf %75, %76 : vector<1x32xf32>
    %78 = math.rsqrt %77 : vector<1x32xf32>
    %79 = arith.mulf %61, %78 : vector<1x32xf32>
    %80 = arith.mulf %69, %79 : vector<1x32xf32>
    %81 = arith.subf %62, %80 : vector<1x32xf32>
    %82 = vector.broadcast %79 : vector<1x32xf32> to vector<8x32xf32>
    %83 = arith.mulf %60, %82 : vector<8x32xf32>
    %84 = vector.broadcast %81 : vector<1x32xf32> to vector<8x32xf32>
    %85 = arith.addf %83, %84 : vector<8x32xf32>
    %cst_41 = arith.constant 0.000000e+00 : f32
    %86 = vector.broadcast %cst_41 : f32 to vector<8x32xf32>
    %87 = arith.maximumf %85, %86 : vector<8x32xf32>
    %c0_42 = arith.constant 0 : index
    %c0_43 = arith.constant 0 : index
    %88 = vector.load %arg7[%c0_42, %c0_43] : memref<16x32xf32, #tpu.memory_space<vmem>>, vector<16x32xf32>
    %cst_44 = arith.constant dense<0.000000e+00> : vector<8x32xf32>
    %89 = tpu.matmul %0, %88, %cst_44 {dimension_numbers = #tpu.dot_dimension_numbers<[1], [0], [0], [1], [0, 0, 1, 1], [], []>} : vector<8x16xf32>, vector<16x32xf32>, vector<8x32xf32> -> vector<8x32xf32>
    %c0_45 = arith.constant 0 : index
    %c0_46 = arith.constant 0 : index
    %90 = vector.load %arg8[%c0_45, %c0_46] : memref<1x32xf32, #tpu.memory_space<vmem>>, vector<1x32xf32>
    %c0_47 = arith.constant 0 : index
    %c0_48 = arith.constant 0 : index
    %91 = vector.load %arg9[%c0_47, %c0_48] : memref<1x32xf32, #tpu.memory_space<vmem>>, vector<1x32xf32>
    %cst_49 = arith.constant dense<0.000000e+00> : vector<32xf32>
    %92 = vector.multi_reduction <add>, %89, %cst_49 [0] : vector<8x32xf32> to vector<32xf32>
    %93 = vector.shape_cast %92 : vector<32xf32> to vector<1x32xf32>
    %94 = arith.mulf %89, %89 : vector<8x32xf32>
    %cst_50 = arith.constant dense<0.000000e+00> : vector<32xf32>
    %95 = vector.multi_reduction <add>, %94, %cst_50 [0] : vector<8x32xf32> to vector<32xf32>
    %96 = vector.shape_cast %95 : vector<32xf32> to vector<1x32xf32>
    %cst_51 = arith.constant 1.250000e-01 : f32
    %97 = vector.broadcast %cst_51 : f32 to vector<1x32xf32>
    %98 = arith.mulf %93, %97 : vector<1x32xf32>
    %cst_52 = arith.constant 1.250000e-01 : f32
    %99 = vector.broadcast %cst_52 : f32 to vector<1x32xf32>
    %100 = arith.mulf %96, %99 : vector<1x32xf32>
    %101 = arith.mulf %98, %98 : vector<1x32xf32>
    %102 = arith.subf %100, %101 : vector<1x32xf32>
    %cst_53 = arith.constant 0.000000e+00 : f32
    %103 = vector.broadcast %cst_53 : f32 to vector<1x32xf32>
    %104 = arith.maximumf %102, %103 : vector<1x32xf32>
    %cst_54 = arith.constant 9.99999974E-6 : f32
    %105 = vector.broadcast %cst_54 : f32 to vector<1x32xf32>
    %106 = arith.addf %104, %105 : vector<1x32xf32>
    %107 = math.rsqrt %106 : vector<1x32xf32>
    %108 = arith.mulf %90, %107 : vector<1x32xf32>
    %109 = arith.mulf %98, %108 : vector<1x32xf32>
    %110 = arith.subf %91, %109 : vector<1x32xf32>
    %111 = vector.broadcast %108 : vector<1x32xf32> to vector<8x32xf32>
    %112 = arith.mulf %89, %111 : vector<8x32xf32>
    %113 = vector.broadcast %110 : vector<1x32xf32> to vector<8x32xf32>
    %114 = arith.addf %112, %113 : vector<8x32xf32>
    %115 = arith.addf %87, %114 : vector<8x32xf32>
    %cst_55 = arith.constant 0.000000e+00 : f32
    %116 = vector.broadcast %cst_55 : f32 to vector<8x32xf32>
    %117 = arith.maximumf %115, %116 : vector<8x32xf32>
    %c0_56 = arith.constant 0 : index
    %c0_57 = arith.constant 0 : index
    %118 = vector.load %arg10[%c0_56, %c0_57] : memref<32x128xf32, #tpu.memory_space<vmem>>, vector<32x128xf32>
    %cst_58 = arith.constant dense<0.000000e+00> : vector<8x128xf32>
    %119 = tpu.matmul %117, %118, %cst_58 {dimension_numbers = #tpu.dot_dimension_numbers<[1], [0], [0], [1], [0, 0, 1, 1], [], []>} : vector<8x32xf32>, vector<32x128xf32>, vector<8x128xf32> -> vector<8x128xf32>
    %c0_59 = arith.constant 0 : index
    %c0_60 = arith.constant 0 : index
    %120 = vector.load %arg11[%c0_59, %c0_60] : memref<1x128xf32, #tpu.memory_space<vmem>>, vector<1x128xf32>
    %121 = vector.broadcast %120 : vector<1x128xf32> to vector<8x128xf32>
    %122 = arith.addf %119, %121 : vector<8x128xf32>
    %c0_61 = arith.constant 0 : index
    %c0_62 = arith.constant 0 : index
    %123 = vector.load %arg12[%c0_61, %c0_62] : memref<8x128xf32, #tpu.memory_space<vmem>>, vector<8x128xf32>
    tpu.vector_store %arg12[%c0_61, %c0_62], %122 {strides = array<i32>} : memref<8x128xf32, #tpu.memory_space<vmem>>, vector<8x128xf32>,
    return
  }
}

</mosaic_0001>

<llo_original>
// kernel: tpu_custom_call.1
$region0: #{tpu_custom_call.1}
  #allocation0 [shape = 'u32[]', space=smem, size = 0x4, offset = 0x4, fixed_abs, tag = 'smem constant byte address 0x4 - core index']
  #allocation1 [shape = 'u32[144,128]{1,0:T(1,128)}', space=vmem, size = 0x12000, scoped, tag = 'internal scratch']
  %s0 = inlined_call_operand.hbm [shape: f32[8,16], index: 0, kind: input, shape index: {}]
  %s1 = inlined_call_operand.hbm [shape: f32[16,32], index: 1, kind: input, shape index: {}]
  %s2 = inlined_call_operand.vmem [shape: f32[1,32], index: 2, kind: input, shape index: {}]
  %s3 = inlined_call_operand.vmem [shape: f32[1,32], index: 3, kind: input, shape index: {}]
  %s4 = inlined_call_operand.hbm [shape: f32[32,32], index: 4, kind: input, shape index: {}]
  %s5 = inlined_call_operand.vmem [shape: f32[1,32], index: 5, kind: input, shape index: {}]
  %s6 = inlined_call_operand.vmem [shape: f32[1,32], index: 6, kind: input, shape index: {}]
  %s7 = inlined_call_operand.hbm [shape: f32[16,32], index: 7, kind: input, shape index: {}]
  %s8 = inlined_call_operand.vmem [shape: f32[1,32], index: 8, kind: input, shape index: {}]
  %s9 = inlined_call_operand.hbm [shape: f32[1,32], index: 9, kind: input, shape index: {}]
  %s10 = inlined_call_operand.vmem [shape: f32[32,128], index: 10, kind: input, shape index: {}]
  %s11 = inlined_call_operand.vmem [shape: f32[1,128], index: 11, kind: input, shape index: {}]
  %s12 = inlined_call_operand.hbm [shape: f32[8,128], index: 12, kind: output, shape index: {}]
  %s13 = sld [smem:[#allocation0]]
  $region78: #{tpu_custom_call.1} parent=0
    _
  %s15 = ssub.s32 1, %s13
  %s16 = scalar_select 0, %s15, %s13
  $region1: #{tpu_custom_call.1} parent=0
    #allocation2 [shape = 'u8[4096]{0}', space=vmem, size = 0x1000, scoped, tag = 'input window, operand 0, single buffered']
    #allocation3 [shape = 's32[1]{0}', space=sflag, size = 0x4, scoped, tag = 'scoped memory for tpu_custom_call.1']
    #allocation4 [shape = 's32[1]{0}', space=sflag, size = 0x4, scoped, tag = 'scoped memory for tpu_custom_call.1']
    #allocation5 [shape = 'u8[8192]{0}', space=vmem, size = 0x2000, scoped, tag = 'input window, operand 1, single buffered']
    #allocation6 [shape = 's32[1]{0}', space=sflag, size = 0x4, scoped, tag = 'scoped memory for tpu_custom_call.1']
    #allocation7 [shape = 'u8[16384]{0}', space=vmem, size = 0x4000, scoped, tag = 'input window, operand 4, single buffered']
    #allocation8 [shape = 'u8[8192]{0}', space=vmem, size = 0x2000, scoped, tag = 'input window, operand 7, single buffered']
    #allocation9 [shape = 's32[1]{0}', space=sflag, size = 0x4, scoped, tag = 'scoped memory for tpu_custom_call.1']
    #allocation10 [shape = 'u8[512]{0}', space=vmem, size = 0x400, scoped, tag = 'input window, operand 9, single buffered']
    #allocation11 [shape = 'u8[4096]{0}', space=vmem, size = 0x1000, scoped, tag = 'output window, operand 0, single buffered']
    %17 = vsyncpa [#allocation3], 0
    %18 = vsyncpa [#allocation6], 0
    %19 = vsyncpa [#allocation9], 0
    %20 = vsyncpa [#allocation4], 0
    // Predicated region
    $region2: #{tpu_custom_call.1} parent=1 // pred_check
      _
    $region3: #{tpu_custom_call.1} parent=1 // pred_check_branch
      %22 = sbr.rel (0) target = $region5
    $region4: #{tpu_custom_call.1} parent=1 // pred_region
      %s24 = ssub.s32 128, 128
      %25 = vsyncadd [#allocation3], %s24
      %s27 = sshll.u32 [#allocation2], 4
      %s28 = int_to_ptr.vmem [resolvable:$true] %s27
      %30 = dma.hbm_to_vmem [thread:$0]  %s0, 128, %s28, [#allocation3]
    $region5: #{tpu_custom_call.1} parent=1 // pred_fallthru
      _
    // Predicated region
    $region6: #{tpu_custom_call.1} parent=1 // pred_check
      _
    $region7: #{tpu_custom_call.1} parent=1 // pred_check_branch
      %32 = sbr.rel (0) target = $region9
    $region8: #{tpu_custom_call.1} parent=1 // pred_region
      %s34 = ssub.s32 256, 256
      %35 = vsyncadd [#allocation6], %s34
      %s36 = sshll.u32 [#allocation5], 4
      %s37 = int_to_ptr.vmem [resolvable:$true] %s36
      %42 = dma.hbm_to_vmem [thread:$0]  %s1, 256, %s37, [#allocation6], 128, 128, 8
    $region9: #{tpu_custom_call.1} parent=1 // pred_fallthru
      _
    // Predicated region
    $region10: #{tpu_custom_call.1} parent=1 // pred_check
      _
    $region11: #{tpu_custom_call.1} parent=1 // pred_check_branch
      %44 = sbr.rel (0) target = $region13
    $region12: #{tpu_custom_call.1} parent=1 // pred_region
      _
    $region13: #{tpu_custom_call.1} parent=1 // pred_fallthru
      _
    // Predicated region
    $region14: #{tpu_custom_call.1} parent=1 // pred_check
      _
    $region15: #{tpu_custom_call.1} parent=1 // pred_check_branch
      %46 = sbr.rel (0) target = $region17
    $region16: #{tpu_custom_call.1} parent=1 // pred_region
      _
    $region17: #{tpu_custom_call.1} parent=1 // pred_fallthru
      _
    // Predicated region
    $region18: #{tpu_custom_call.1} parent=1 // pred_check
      _
    $region19: #{tpu_custom_call.1} parent=1 // pred_check_branch
      %48 = sbr.rel (0) target = $region21
    $region20: #{tpu_custom_call.1} parent=1 // pred_region
      %s50 = ssub.s32 512, 512
      %51 = vsyncadd [#allocation6], %s50
      %s52 = sshll.u32 [#allocation7], 4
      %s53 = int_to_ptr.vmem [resolvable:$true] %s52
      %58 = dma.hbm_to_vmem [thread:$0]  %s4, 512, %s53, [#allocation6], 128, 128, 8
    $region21: #{tpu_custom_call.1} parent=1 // pred_fallthru
      _
    // Predicated region
    $region22: #{tpu_custom_call.1} parent=1 // pred_check
      _
    $region23: #{tpu_custom_call.1} parent=1 // pred_check_branch
      %60 = sbr.rel (0) target = $region25
    $region24: #{tpu_custom_call.1} parent=1 // pred_region
      _
    $region25: #{tpu_custom_call.1} parent=1 // pred_fallthru
      _
    // Predicated region
    $region26: #{tpu_custom_call.1} parent=1 // pred_check
      _
    $region27: #{tpu_custom_call.1} parent=1 // pred_check_branch
      %62 = sbr.rel (0) target = $region29
    $region28: #{tpu_custom_call.1} parent=1 // pred_region
      _
    $region29: #{tpu_custom_call.1} parent=1 // pred_fallthru
      _
    // Predicated region
    $region30: #{tpu_custom_call.1} parent=1 // pred_check
      _
    $region31: #{tpu_custom_call.1} parent=1 // pred_check_branch
      %64 = sbr.rel (0) target = $region33
    $region32: #{tpu_custom_call.1} parent=1 // pred_region
      %s66 = ssub.s32 256, 256
      %67 = vsyncadd [#allocation9], %s66
      %s68 = sshll.u32 [#allocation8], 4
      %s69 = int_to_ptr.vmem [resolvable:$true] %s68
      %74 = dma.hbm_to_vmem [thread:$0]  %s7, 256, %s69, [#allocation9], 128, 128, 8
    $region33: #{tpu_custom_call.1} parent=1 // pred_fallthru
      _
    // Predicated region
    $region34: #{tpu_custom_call.1} parent=1 // pred_check
      _
    $region35: #{tpu_custom_call.1} parent=1 // pred_check_branch
      %76 = sbr.rel (0) target = $region37
    $region36: #{tpu_custom_call.1} parent=1 // pred_region
      _
    $region37: #{tpu_custom_call.1} parent=1 // pred_fallthru
      _
    // Predicated region
    $region38: #{tpu_custom_call.1} parent=1 // pred_check
      _
    $region39: #{tpu_custom_call.1} parent=1 // pred_check_branch
      %78 = sbr.rel (0) target = $region41
    $region40: #{tpu_custom_call.1} parent=1 // pred_region
      %s80 = ssub.s32 16, 16
      %81 = vsyncadd [#allocation9], %s80
      %s83 = sshll.u32 [#allocation10], 4
      %s84 = int_to_ptr.vmem [resolvable:$true] %s83
      %86 = dma.hbm_to_vmem [thread:$0]  %s9, 16, %s84, [#allocation9]
    $region41: #{tpu_custom_call.1} parent=1 // pred_fallthru
      _
    // Predicated region
    $region42: #{tpu_custom_call.1} parent=1 // pred_check
      _
    $region43: #{tpu_custom_call.1} parent=1 // pred_check_branch
      %88 = sbr.rel (0) target = $region45
    $region44: #{tpu_custom_call.1} parent=1 // pred_region
      _
    $region45: #{tpu_custom_call.1} parent=1 // pred_fallthru
      _
    // Predicated region
    $region46: #{tpu_custom_call.1} parent=1 // pred_check
      _
    $region47: #{tpu_custom_call.1} parent=1 // pred_check_branch
      %90 = sbr.rel (0) target = $region49
    $region48: #{tpu_custom_call.1} parent=1 // pred_region
      _
    $region49: #{tpu_custom_call.1} parent=1 // pred_fallthru
      _
    // Predicated region
    $region50: #{tpu_custom_call.1} parent=1 // pred_check
      _
    $region51: #{tpu_custom_call.1} parent=1 // pred_check_branch
      %92 = sbr.rel (0) target = $region53
    $region52: #{tpu_custom_call.1} parent=1 // pred_region
      %93 = dma.done [#allocation3], 128
    $region53: #{tpu_custom_call.1} parent=1 // pred_fallthru
      _
    // Predicated region
    $region54: #{tpu_custom_call.1} parent=1 // pred_check
      _
    $region55: #{tpu_custom_call.1} parent=1 // pred_check_branch
      %95 = sbr.rel (0) target = $region57
    $region56: #{tpu_custom_call.1} parent=1 // pred_region
      %96 = dma.done [#allocation6], 256
    $region57: #{tpu_custom_call.1} parent=1 // pred_fallthru
      _
    // Predicated region
    $region58: #{tpu_custom_call.1} parent=1 // pred_check
      _
    $region59: #{tpu_custom_call.1} parent=1 // pred_check_branch
      %98 = sbr.rel (0) target = $region61
    $region60: #{tpu_custom_call.1} parent=1 // pred_region
      %99 = dma.done [#allocation6], 512
    $region61: #{tpu_custom_call.1} parent=1 // pred_fallthru
      _
    // Predicated region
    $region62: #{tpu_custom_call.1} parent=1 // pred_check
      _
    $region63: #{tpu_custom_call.1} parent=1 // pred_check_branch
      %101 = sbr.rel (0) target = $region65
    $region64: #{tpu_custom_call.1} parent=1 // pred_region
      %102 = dma.done [#allocation9], 256
    $region65: #{tpu_custom_call.1} parent=1 // pred_fallthru
      _
    // Predicated region
    $region66: #{tpu_custom_call.1} parent=1 // pred_check
      _
    $region67: #{tpu_custom_call.1} parent=1 // pred_check_branch
      %104 = sbr.rel (0) target = $region69
    $region68: #{tpu_custom_call.1} parent=1 // pred_region
      %105 = dma.done [#allocation9], 16
    $region69: #{tpu_custom_call.1} parent=1 // pred_fallthru
      _
    %v106 = vld [vmem:[#allocation2] sm:$0xff]
    %v107 = vld [vmem:[#allocation5] sm:$0xff]
    %v108 = vld [vmem:[#allocation5 + $0x8] sm:$0xff]
    %vm109 = vcmask 130048
    %v111 = vsel %vm109, %v106, 0
    %113 = vmatprep.subr.mxu0 0.0
    %114 = vmatpush1.msra.mxu0 %v107
    %115 = vmatprep.subr.mxu0 0.0
    %116 = vmatpush1.msra.mxu0 %v108
    %117 = vmatprep.subr.mxu0 0.0
    %118 = vmatpush1.msra.mxu0 0.0
    %119 = vmatprep.subr.mxu0 0.0
    %120 = vmatpush1.msra.mxu0 0.0
    %121 = vmatprep.subr.mxu0 0.0
    %122 = vmatpush1.msra.mxu0 0.0
    %123 = vmatprep.subr.mxu0 0.0
    %124 = vmatpush1.msra.mxu0 0.0
    %125 = vmatprep.subr.mxu0 0.0
    %126 = vmatpush1.msra.mxu0 0.0
    %127 = vmatprep.subr.mxu0 0.0
    %128 = vmatpush1.msra.mxu0 0.0
    %129 = vmatprep.subr.mxu0 0.0
    %130 = vmatpush1.msra.mxu0 0.0
    %131 = vmatprep.subr.mxu0 0.0
    %132 = vmatpush1.msra.mxu0 0.0
    %133 = vmatprep.subr.mxu0 0.0
    %134 = vmatpush1.msra.mxu0 0.0
    %135 = vmatprep.subr.mxu0 0.0
    %136 = vmatpush1.msra.mxu0 0.0
    %137 = vmatprep.subr.mxu0 0.0
    %138 = vmatpush1.msra.mxu0 0.0
    %139 = vmatprep.subr.mxu0 0.0
    %140 = vmatpush1.msra.mxu0 0.0
    %141 = vmatprep.subr.mxu0 0.0
    %142 = vmatpush1.msra.mxu0 0.0
    %143 = vmatprep.subr.mxu0 0.0
    %144 = vmatpush1.msra.mxu0 0.0
    %145 = vmatprep.subr.mxu0 0.0
    %146 = vmatpush1.msra.mxu0 0.0
    %147 = vmatprep.subr.mxu0 0.0
    %148 = vmatpush1.msra.mxu0 0.0
    %149 = vmatprep.subr.mxu0 0.0
    %150 = vmatpush1.msra.mxu0 0.0
    %151 = vmatprep.subr.mxu0 0.0
    %152 = vmatpush1.msra.mxu0 0.0
    %153 = vmatprep.subr.mxu0 0.0
    %154 = vmatpush1.msra.mxu0 0.0
    %155 = vmatprep.subr.mxu0 0.0
    %156 = vmatpush1.msra.mxu0 0.0
    %157 = vmatprep.subr.mxu0 0.0
    %158 = vmatpush1.msra.mxu0 0.0
    %159 = vmatprep.subr.mxu0 0.0
    %160 = vmatpush1.msra.mxu0 0.0
    %161 = vmatprep.subr.mxu0 0.0
    %162 = vmatpush1.msra.mxu0 0.0
    %163 = vmatprep.subr.mxu0 0.0
    %164 = vmatpush1.msra.mxu0 0.0
    %165 = vmatprep.subr.mxu0 0.0
    %166 = vmatpush1.msra.mxu0 0.0
    %167 = vmatprep.subr.mxu0 0.0
    %168 = vmatpush1.msra.mxu0 0.0
    %169 = vmatprep.subr.mxu0 0.0
    %170 = vmatpush1.msra.mxu0 0.0
    %171 = vmatprep.subr.mxu0 0.0
    %172 = vmatpush1.msra.mxu0 0.0
    %173 = vmatprep.subr.mxu0 0.0
    %174 = vmatpush1.msra.mxu0 0.0
    %175 = vmatprep.subr.mxu0 0.0
    %176 = vmatpush1.msra.mxu0 0.0
    %177 = vmatprep.mubr.f32.mxu0 0.0
    %178 = vmatmul.mubr.f32.gmra.mrb[0].mxu0 %v111
    %v179 = vpop.f32.mrb[0].mxu0
    %v180 = vadd.f32 0.0, %v179
    %v181 = vpop.f32.mrb[0].mxu0
    %182 = vdwg.mxu0
    %v183 = vld [vmem:[%s2] sm:$0x1]
    %v184 = vld [vmem:[%s3] sm:$0x1]
    %vm185 = vcmask 261120
    %v186 = vsel %vm185, %v180, 0.0
    %v187 = vrot.slane %v186, 4
    %v188 = vadd.f32 %v186, %v187
    %v189 = vrot.slane %v188, 2
    %v190 = vadd.f32 %v188, %v189
    %v191 = vrot.slane %v190, 1
    %v192 = vadd.f32 %v190, %v191
    %v193 = vmul.f32 %v180, %v180
    %v194 = vsel %vm185, %v193, 0.0
    %v195 = vrot.slane %v194, 4
    %v196 = vadd.f32 %v194, %v195
    %v197 = vrot.slane %v196, 2
    %v198 = vadd.f32 %v196, %v197
    %v199 = vrot.slane %v198, 1
    %v200 = vadd.f32 %v198, %v199
    %v201 = vmul.f32 %v192, 0.125
    %v202 = vmul.f32 %v200, 0.125
    %v203 = vmul.f32 %v201, %v201
    %v204 = vsub.f32 %v202, %v203
    %v205 = vmax.f32 %v204, 0.0
    %v206 = vadd.f32 %v205, 1e-05
    %v207 = vrsqrt.pop %v206
    %v208 = vmul.f32 %v183, %v207
    %v209 = vmul.f32 %v201, %v208
    %v210 = vsub.f32 %v184, %v209
    %v212 = vlaneseq
    %v213 = vshrl.u32 %v212, 7
    %v214 = vsub.s32 0, %v213
    %v215 = vrot.slane %v208, %v214
    %v217 = vmul.f32 %v180, %v215
    %v219 = vlaneseq
    %v220 = vshrl.u32 %v219, 7
    %v221 = vsub.s32 0, %v220
    %v222 = vrot.slane %v210, %v221
    %v224 = vadd.f32 %v217, %v222
    %v225 = vmax.f32 %v224, 0.0
    %v226 = vld [vmem:[#allocation7] sm:$0xff]
    %v227 = vld [vmem:[#allocation7 + $0x8] sm:$0xff]
    %v228 = vld [vmem:[#allocation7 + $0x10] sm:$0xff]
    %v229 = vld [vmem:[#allocation7 + $0x18] sm:$0xff]
    %v231 = vsel %vm185, %v225, 0
    %233 = vmatprep.subr.mxu0 0.0
    %234 = vmatpush1.msra.mxu0 %v226
    %235 = vmatprep.subr.mxu0 0.0
    %236 = vmatpush1.msra.mxu0 %v227
    %237 = vmatprep.subr.mxu0 0.0
    %238 = vmatpush1.msra.mxu0 %v228
    %239 = vmatprep.subr.mxu0 0.0
    %240 = vmatpush1.msra.mxu0 %v229
    %241 = vmatprep.subr.mxu0 0.0
    %242 = vmatpush1.msra.mxu0 0.0
    %243 = vmatprep.subr.mxu0 0.0
    %244 = vmatpush1.msra.mxu0 0.0
    %245 = vmatprep.subr.mxu0 0.0
    %246 = vmatpush1.msra.mxu0 0.0
    %247 = vmatprep.subr.mxu0 0.0
    %248 = vmatpush1.msra.mxu0 0.0
    %249 = vmatprep.subr.mxu0 0.0
    %250 = vmatpush1.msra.mxu0 0.0
    %251 = vmatprep.subr.mxu0 0.0
    %252 = vmatpush1.msra.mxu0 0.0
    %253 = vmatprep.subr.mxu0 0.0
    %254 = vmatpush1.msra.mxu0 0.0
    %255 = vmatprep.subr.mxu0 0.0
    %256 = vmatpush1.msra.mxu0 0.0
    %257 = vmatprep.subr.mxu0 0.0
    %258 = vmatpush1.msra.mxu0 0.0
    %259 = vmatprep.subr.mxu0 0.0
    %260 = vmatpush1.msra.mxu0 0.0
    %261 = vmatprep.subr.mxu0 0.0
    %262 = vmatpush1.msra.mxu0 0.0
    %263 = vmatprep.subr.mxu0 0.0
    %264 = vmatpush1.msra.mxu0 0.0
    %265 = vmatprep.subr.mxu0 0.0
    %266 = vmatpush1.msra.mxu0 0.0
    %267 = vmatprep.subr.mxu0 0.0
    %268 = vmatpush1.msra.mxu0 0.0
    %269 = vmatprep.subr.mxu0 0.0
    %270 = vmatpush1.msra.mxu0 0.0
    %271 = vmatprep.subr.mxu0 0.0
    %272 = vmatpush1.msra.mxu0 0.0
    %273 = vmatprep.subr.mxu0 0.0
    %274 = vmatpush1.msra.mxu0 0.0
    %275 = vmatprep.subr.mxu0 0.0
    %276 = vmatpush1.msra.mxu0 0.0
    %277 = vmatprep.subr.mxu0 0.0
    %278 = vmatpush1.msra.mxu0 0.0
    %279 = vmatprep.subr.mxu0 0.0
    %280 = vmatpush1.msra.mxu0 0.0
    %281 = vmatprep.subr.mxu0 0.0
    %282 = vmatpush1.msra.mxu0 0.0
    %283 = vmatprep.subr.mxu0 0.0
    %284 = vmatpush1.msra.mxu0 0.0
    %285 = vmatprep.subr.mxu0 0.0
    %286 = vmatpush1.msra.mxu0 0.0
    %287 = vmatprep.subr.mxu0 0.0
    %288 = vmatpush1.msra.mxu0 0.0
    %289 = vmatprep.subr.mxu0 0.0
    %290 = vmatpush1.msra.mxu0 0.0
    %291 = vmatprep.subr.mxu0 0.0
    %292 = vmatpush1.msra.mxu0 0.0
    %293 = vmatprep.subr.mxu0 0.0
    %294 = vmatpush1.msra.mxu0 0.0
    %295 = vmatprep.subr.mxu0 0.0
    %296 = vmatpush1.msra.mxu0 0.0
    %297 = vmatprep.mubr.f32.mxu0 0.0
    %298 = vmatmul.mubr.f32.gmra.mrb[0].mxu0 %v231
    %v299 = vpop.f32.mrb[0].mxu0
    %v300 = vadd.f32 0.0, %v299
    %v301 = vpop.f32.mrb[0].mxu0
    %302 = vdwg.mxu0
    %v303 = vld [vmem:[%s5] sm:$0x1]
    %v304 = vld [vmem:[%s6] sm:$0x1]
    %v305 = vsel %vm185, %v300, 0.0
    %v306 = vrot.slane %v305, 4
    %v307 = vadd.f32 %v305, %v306
    %v308 = vrot.slane %v307, 2
    %v309 = vadd.f32 %v307, %v308
    %v310 = vrot.slane %v309, 1
    %v311 = vadd.f32 %v309, %v310
    %v312 = vmul.f32 %v300, %v300
    %v313 = vsel %vm185, %v312, 0.0
    %v314 = vrot.slane %v313, 4
    %v315 = vadd.f32 %v313, %v314
    %v316 = vrot.slane %v315, 2
    %v317 = vadd.f32 %v315, %v316
    %v318 = vrot.slane %v317, 1
    %v319 = vadd.f32 %v317, %v318
    %v320 = vmul.f32 %v311, 0.125
    %v321 = vmul.f32 %v319, 0.125
    %v322 = vmul.f32 %v320, %v320
    %v323 = vsub.f32 %v321, %v322
    %v324 = vmax.f32 %v323, 0.0
    %v325 = vadd.f32 %v324, 1e-05
    %v326 = vrsqrt.pop %v325
    %v327 = vmul.f32 %v303, %v326
    %v328 = vmul.f32 %v320, %v327
    %v329 = vsub.f32 %v304, %v328
    %v331 = vlaneseq
    %v332 = vshrl.u32 %v331, 7
    %v333 = vsub.s32 0, %v332
    %v334 = vrot.slane %v327, %v333
    %v336 = vmul.f32 %v300, %v334
    %v338 = vlaneseq
    %v339 = vshrl.u32 %v338, 7
    %v340 = vsub.s32 0, %v339
    %v341 = vrot.slane %v329, %v340
    %v343 = vadd.f32 %v336, %v341
    %v344 = vmax.f32 %v343, 0.0
    %v346 = vsel %vm185, %v344, 0
    %348 = vmatprep.subr.mxu0 0.0
    %349 = vmatpush1.msra.mxu0 %v226
    %350 = vmatprep.subr.mxu0 0.0
    %351 = vmatpush1.msra.mxu0 %v227
    %352 = vmatprep.subr.mxu0 0.0
    %353 = vmatpush1.msra.mxu0 %v228
    %354 = vmatprep.subr.mxu0 0.0
    %355 = vmatpush1.msra.mxu0 %v229
    %356 = vmatprep.subr.mxu0 0.0
    %357 = vmatpush1.msra.mxu0 0.0
    %358 = vmatprep.subr.mxu0 0.0
    %359 = vmatpush1.msra.mxu0 0.0
    %360 = vmatprep.subr.mxu0 0.0
    %361 = vmatpush1.msra.mxu0 0.0
    %362 = vmatprep.subr.mxu0 0.0
    %363 = vmatpush1.msra.mxu0 0.0
    %364 = vmatprep.subr.mxu0 0.0
    %365 = vmatpush1.msra.mxu0 0.0
    %366 = vmatprep.subr.mxu0 0.0
    %367 = vmatpush1.msra.mxu0 0.0
    %368 = vmatprep.subr.mxu0 0.0
    %369 = vmatpush1.msra.mxu0 0.0
    %370 = vmatprep.subr.mxu0 0.0
    %371 = vmatpush1.msra.mxu0 0.0
    %372 = vmatprep.subr.mxu0 0.0
    %373 = vmatpush1.msra.mxu0 0.0
    %374 = vmatprep.subr.mxu0 0.0
    %375 = vmatpush1.msra.mxu0 0.0
    %376 = vmatprep.subr.mxu0 0.0
    %377 = vmatpush1.msra.mxu0 0.0
    %378 = vmatprep.subr.mxu0 0.0
    %379 = vmatpush1.msra.mxu0 0.0
    %380 = vmatprep.subr.mxu0 0.0
    %381 = vmatpush1.msra.mxu0 0.0
    %382 = vmatprep.subr.mxu0 0.0
    %383 = vmatpush1.msra.mxu0 0.0
    %384 = vmatprep.subr.mxu0 0.0
    %385 = vmatpush1.msra.mxu0 0.0
    %386 = vmatprep.subr.mxu0 0.0
    %387 = vmatpush1.msra.mxu0 0.0
    %388 = vmatprep.subr.mxu0 0.0
    %389 = vmatpush1.msra.mxu0 0.0
    %390 = vmatprep.subr.mxu0 0.0
    %391 = vmatpush1.msra.mxu0 0.0
    %392 = vmatprep.subr.mxu0 0.0
    %393 = vmatpush1.msra.mxu0 0.0
    %394 = vmatprep.subr.mxu0 0.0
    %395 = vmatpush1.msra.mxu0 0.0
    %396 = vmatprep.subr.mxu0 0.0
    %397 = vmatpush1.msra.mxu0 0.0
    %398 = vmatprep.subr.mxu0 0.0
    %399 = vmatpush1.msra.mxu0 0.0
    %400 = vmatprep.subr.mxu0 0.0
    %401 = vmatpush1.msra.mxu0 0.0
    %402 = vmatprep.subr.mxu0 0.0
    %403 = vmatpush1.msra.mxu0 0.0
    %404 = vmatprep.subr.mxu0 0.0
    %405 = vmatpush1.msra.mxu0 0.0
    %406 = vmatprep.subr.mxu0 0.0
    %407 = vmatpush1.msra.mxu0 0.0
    %408 = vmatprep.subr.mxu0 0.0
    %409 = vmatpush1.msra.mxu0 0.0
    %410 = vmatprep.subr.mxu0 0.0
    %411 = vmatpush1.msra.mxu0 0.0
    %412 = vmatprep.mubr.f32.mxu0 0.0
    %413 = vmatmul.mubr.f32.gmra.mrb[0].mxu0 %v346
    %v414 = vpop.f32.mrb[0].mxu0
    %v415 = vadd.f32 0.0, %v414
    %v416 = vpop.f32.mrb[0].mxu0
    %417 = vdwg.mxu0
    %v418 = vsel %vm185, %v415, 0.0
    %v419 = vrot.slane %v418, 4
    %v420 = vadd.f32 %v418, %v419
    %v421 = vrot.slane %v420, 2
    %v422 = vadd.f32 %v420, %v421
    %v423 = vrot.slane %v422, 1
    %v424 = vadd.f32 %v422, %v423
    %v425 = vmul.f32 %v415, %v415
    %v426 = vsel %vm185, %v425, 0.0
    %v427 = vrot.slane %v426, 4
    %v428 = vadd.f32 %v426, %v427
    %v429 = vrot.slane %v428, 2
    %v430 = vadd.f32 %v428, %v429
    %v431 = vrot.slane %v430, 1
    %v432 = vadd.f32 %v430, %v431
    %v433 = vmul.f32 %v424, 0.125
    %v434 = vmul.f32 %v432, 0.125
    %v435 = vmul.f32 %v433, %v433
    %v436 = vsub.f32 %v434, %v435
    %v437 = vmax.f32 %v436, 0.0
    %v438 = vadd.f32 %v437, 1e-05
    %v439 = vrsqrt.pop %v438
    %v440 = vmul.f32 %v303, %v439
    %v441 = vmul.f32 %v433, %v440
    %v442 = vsub.f32 %v304, %v441
    %v444 = vlaneseq
    %v445 = vshrl.u32 %v444, 7
    %v446 = vsub.s32 0, %v445
    %v447 = vrot.slane %v440, %v446
    %v449 = vmul.f32 %v415, %v447
    %v451 = vlaneseq
    %v452 = vshrl.u32 %v451, 7
    %v453 = vsub.s32 0, %v452
    %v454 = vrot.slane %v442, %v453
    %v456 = vadd.f32 %v449, %v454
    %v457 = vmax.f32 %v456, 0.0
    %v458 = vld [vmem:[#allocation8] sm:$0xff]
    %v459 = vld [vmem:[#allocation8 + $0x8] sm:$0xff]
    %460 = vmatprep.subr.mxu0 0.0
    %461 = vmatpush1.msra.mxu0 %v458
    %462 = vmatprep.subr.mxu0 0.0
    %463 = vmatpush1.msra.mxu0 %v459
    %464 = vmatprep.subr.mxu0 0.0
    %465 = vmatpush1.msra.mxu0 0.0
    %466 = vmatprep.subr.mxu0 0.0
    %467 = vmatpush1.msra.mxu0 0.0
    %468 = vmatprep.subr.mxu0 0.0
    %469 = vmatpush1.msra.mxu0 0.0
    %470 = vmatprep.subr.mxu0 0.0
    %471 = vmatpush1.msra.mxu0 0.0
    %472 = vmatprep.subr.mxu0 0.0
    %473 = vmatpush1.msra.mxu0 0.0
    %474 = vmatprep.subr.mxu0 0.0
    %475 = vmatpush1.msra.mxu0 0.0
    %476 = vmatprep.subr.mxu0 0.0
    %477 = vmatpush1.msra.mxu0 0.0
    %478 = vmatprep.subr.mxu0 0.0
    %479 = vmatpush1.msra.mxu0 0.0
    %480 = vmatprep.subr.mxu0 0.0
    %481 = vmatpush1.msra.mxu0 0.0
    %482 = vmatprep.subr.mxu0 0.0
    %483 = vmatpush1.msra.mxu0 0.0
    %484 = vmatprep.subr.mxu0 0.0
    %485 = vmatpush1.msra.mxu0 0.0
    %486 = vmatprep.subr.mxu0 0.0
    %487 = vmatpush1.msra.mxu0 0.0
    %488 = vmatprep.subr.mxu0 0.0
    %489 = vmatpush1.msra.mxu0 0.0
    %490 = vmatprep.subr.mxu0 0.0
    %491 = vmatpush1.msra.mxu0 0.0
    %492 = vmatprep.subr.mxu0 0.0
    %493 = vmatpush1.msra.mxu0 0.0
    %494 = vmatprep.subr.mxu0 0.0
    %495 = vmatpush1.msra.mxu0 0.0
    %496 = vmatprep.subr.mxu0 0.0
    %497 = vmatpush1.msra.mxu0 0.0
    %498 = vmatprep.subr.mxu0 0.0
    %499 = vmatpush1.msra.mxu0 0.0
    %500 = vmatprep.subr.mxu0 0.0
    %501 = vmatpush1.msra.mxu0 0.0
    %502 = vmatprep.subr.mxu0 0.0
    %503 = vmatpush1.msra.mxu0 0.0
    %504 = vmatprep.subr.mxu0 0.0
    %505 = vmatpush1.msra.mxu0 0.0
    %506 = vmatprep.subr.mxu0 0.0
    %507 = vmatpush1.msra.mxu0 0.0
    %508 = vmatprep.subr.mxu0 0.0
    %509 = vmatpush1.msra.mxu0 0.0
    %510 = vmatprep.subr.mxu0 0.0
    %511 = vmatpush1.msra.mxu0 0.0
    %512 = vmatprep.subr.mxu0 0.0
    %513 = vmatpush1.msra.mxu0 0.0
    %514 = vmatprep.subr.mxu0 0.0
    %515 = vmatpush1.msra.mxu0 0.0
    %516 = vmatprep.subr.mxu0 0.0
    %517 = vmatpush1.msra.mxu0 0.0
    %518 = vmatprep.subr.mxu0 0.0
    %519 = vmatpush1.msra.mxu0 0.0
    %520 = vmatprep.subr.mxu0 0.0
    %521 = vmatpush1.msra.mxu0 0.0
    %522 = vmatprep.subr.mxu0 0.0
    %523 = vmatpush1.msra.mxu0 0.0
    %524 = vmatprep.mubr.f32.mxu0 0.0
    %525 = vmatmul.mubr.f32.gmra.mrb[0].mxu0 %v111
    %v526 = vpop.f32.mrb[0].mxu0
    %v527 = vadd.f32 0.0, %v526
    %v528 = vpop.f32.mrb[0].mxu0
    %529 = vdwg.mxu0
    %v530 = vld [vmem:[%s8] sm:$0x1]
    %v531 = vld [vmem:[#allocation10] sm:$0x1]
    %v532 = vsel %vm185, %v527, 0.0
    %v533 = vrot.slane %v532, 4
    %v534 = vadd.f32 %v532, %v533
    %v535 = vrot.slane %v534, 2
    %v536 = vadd.f32 %v534, %v535
    %v537 = vrot.slane %v536, 1
    %v538 = vadd.f32 %v536, %v537
    %v539 = vmul.f32 %v527, %v527
    %v540 = vsel %vm185, %v539, 0.0
    %v541 = vrot.slane %v540, 4
    %v542 = vadd.f32 %v540, %v541
    %v543 = vrot.slane %v542, 2
    %v544 = vadd.f32 %v542, %v543
    %v545 = vrot.slane %v544, 1
    %v546 = vadd.f32 %v544, %v545
    %v547 = vmul.f32 %v538, 0.125
    %v548 = vmul.f32 %v546, 0.125
    %v549 = vmul.f32 %v547, %v547
    %v550 = vsub.f32 %v548, %v549
    %v551 = vmax.f32 %v550, 0.0
    %v552 = vadd.f32 %v551, 1e-05
    %v553 = vrsqrt.pop %v552
    %v554 = vmul.f32 %v530, %v553
    %v555 = vmul.f32 %v547, %v554
    %v556 = vsub.f32 %v531, %v555
    %v558 = vlaneseq
    %v559 = vshrl.u32 %v558, 7
    %v560 = vsub.s32 0, %v559
    %v561 = vrot.slane %v554, %v560
    %v563 = vmul.f32 %v527, %v561
    %v565 = vlaneseq
    %v566 = vshrl.u32 %v565, 7
    %v567 = vsub.s32 0, %v566
    %v568 = vrot.slane %v556, %v567
    %v570 = vadd.f32 %v563, %v568
    %v571 = vadd.f32 %v457, %v570
    %v572 = vmax.f32 %v571, 0.0
    %v573 = vld [vmem:[%s10] sm:$0xff]
    %v574 = vld [vmem:[%s10 + $0x8] sm:$0xff]
    %v575 = vld [vmem:[%s10 + $0x10] sm:$0xff]
    %v576 = vld [vmem:[%s10 + $0x18] sm:$0xff]
    %v577 = vld [vmem:[%s11] sm:$0x1]
    %v579 = vlaneseq
    %v580 = vshrl.u32 %v579, 7
    %v581 = vsub.s32 0, %v580
    %v582 = vrot.slane %v577, %v581
    %v585 = vsel %vm185, %v572, 0
    %587 = vmatprep.subr.mxu0 0.0
    %588 = vmatpush1.msra.mxu0 %v573
    %589 = vmatprep.subr.mxu0 0.0
    %590 = vmatpush1.msra.mxu0 %v574
    %591 = vmatprep.subr.mxu0 0.0
    %592 = vmatpush1.msra.mxu0 %v575
    %593 = vmatprep.subr.mxu0 0.0
    %594 = vmatpush1.msra.mxu0 %v576
    %595 = vmatprep.subr.mxu0 0.0
    %596 = vmatpush1.msra.mxu0 0.0
    %597 = vmatprep.subr.mxu0 0.0
    %598 = vmatpush1.msra.mxu0 0.0
    %599 = vmatprep.subr.mxu0 0.0
    %600 = vmatpush1.msra.mxu0 0.0
    %601 = vmatprep.subr.mxu0 0.0
    %602 = vmatpush1.msra.mxu0 0.0
    %603 = vmatprep.subr.mxu0 0.0
    %604 = vmatpush1.msra.mxu0 0.0
    %605 = vmatprep.subr.mxu0 0.0
    %606 = vmatpush1.msra.mxu0 0.0
    %607 = vmatprep.subr.mxu0 0.0
    %608 = vmatpush1.msra.mxu0 0.0
    %609 = vmatprep.subr.mxu0 0.0
    %610 = vmatpush1.msra.mxu0 0.0
    %611 = vmatprep.subr.mxu0 0.0
    %612 = vmatpush1.msra.mxu0 0.0
    %613 = vmatprep.subr.mxu0 0.0
    %614 = vmatpush1.msra.mxu0 0.0
    %615 = vmatprep.subr.mxu0 0.0
    %616 = vmatpush1.msra.mxu0 0.0
    %617 = vmatprep.subr.mxu0 0.0
    %618 = vmatpush1.msra.mxu0 0.0
    %619 = vmatprep.subr.mxu0 0.0
    %620 = vmatpush1.msra.mxu0 0.0
    %621 = vmatprep.subr.mxu0 0.0
    %622 = vmatpush1.msra.mxu0 0.0
    %623 = vmatprep.subr.mxu0 0.0
    %624 = vmatpush1.msra.mxu0 0.0
    %625 = vmatprep.subr.mxu0 0.0
    %626 = vmatpush1.msra.mxu0 0.0
    %627 = vmatprep.subr.mxu0 0.0
    %628 = vmatpush1.msra.mxu0 0.0
    %629 = vmatprep.subr.mxu0 0.0
    %630 = vmatpush1.msra.mxu0 0.0
    %631 = vmatprep.subr.mxu0 0.0
    %632 = vmatpush1.msra.mxu0 0.0
    %633 = vmatprep.subr.mxu0 0.0
    %634 = vmatpush1.msra.mxu0 0.0
    %635 = vmatprep.subr.mxu0 0.0
    %636 = vmatpush1.msra.mxu0 0.0
    %637 = vmatprep.subr.mxu0 0.0
    %638 = vmatpush1.msra.mxu0 0.0
    %639 = vmatprep.subr.mxu0 0.0
    %640 = vmatpush1.msra.mxu0 0.0
    %641 = vmatprep.subr.mxu0 0.0
    %642 = vmatpush1.msra.mxu0 0.0
    %643 = vmatprep.subr.mxu0 0.0
    %644 = vmatpush1.msra.mxu0 0.0
    %645 = vmatprep.subr.mxu0 0.0
    %646 = vmatpush1.msra.mxu0 0.0
    %647 = vmatprep.subr.mxu0 0.0
    %648 = vmatpush1.msra.mxu0 0.0
    %649 = vmatprep.subr.mxu0 0.0
    %650 = vmatpush1.msra.mxu0 0.0
    %651 = vmatprep.mubr.f32.mxu0 0.0
    %652 = vmatmul.mubr.f32.gmra.mrb[0].mxu0 %v585
    %v653 = vpop.f32.mrb[0].mxu0
    %v654 = vadd.f32 %v582, %v653
    %v655 = vpop.f32.mrb[0].mxu0
    %656 = vdwg.mxu0
    %657 = vst [vmem:[#allocation11] sm:$0xff] %v654
    // Predicated region
    $region70: #{tpu_custom_call.1} parent=1 // pred_check
      _
    $region71: #{tpu_custom_call.1} parent=1 // pred_check_branch
      %659 = sbr.rel (0) target = $region73
    $region72: #{tpu_custom_call.1} parent=1 // pred_region
      %s661 = ssub.s32 128, 128
      %662 = vsyncadd [#allocation4], %s661
      %s664 = sshll.u32 [#allocation11], 4
      %s665 = int_to_ptr.vmem [resolvable:$true] %s664
      %667 = dma.vmem_to_hbm [thread:$0]  %s665, 128, %s12, [#allocation4]
    $region73: #{tpu_custom_call.1} parent=1 // pred_fallthru
      _
    // Predicated region
    $region74: #{tpu_custom_call.1} parent=1 // pred_check
      _
    $region75: #{tpu_custom_call.1} parent=1 // pred_check_branch
      %669 = sbr.rel (0) target = $region77
    $region76: #{tpu_custom_call.1} parent=1 // pred_region
      %670 = dma.done [#allocation4], 128
    $region77: #{tpu_custom_call.1} parent=1 // pred_fallthru
      _
    %671 = vsyncpa [#allocation3], 1
    %672 = vsyncpa [#allocation6], 1
    %673 = vsyncpa [#allocation9], 1
    %674 = vsyncpa [#allocation4], 1

</llo_original>
